<compile_context>
chip_gen: v7x
topology: tpu7x:2x2x1
jax: 0.10.0
libtpu: 0.0.40
codegen_flags: <defaults>
</compile_context>

<pallas_src>
import functools
import math

import jax
import jax.numpy as jnp
from jax import lax
from jax.experimental import pallas as pl
from jax.experimental.pallas import tpu as pltpu


_ACTS = {
    "tanh": jnp.tanh,
    "relu": lambda v: jnp.maximum(v, 0.0),
    "sigmoid": jax.nn.sigmoid,
    "gelu": jax.nn.gelu,
    "identity": lambda v: v,
}

_LANE = 128


def _round_up(v, m):
    return ((v + m - 1) // m) * m


def _cdiv(a, b):
    return (a + b - 1) // b


def _tile_options(dim, align, cap):
    """Candidate tiles: full extent (if <= cap, alignment-exempt), then aligned tiles."""
    opts = []
    if dim <= cap:
        opts.append(dim)
    t = align
    aligned = []
    while t <= min(cap, dim):
        if t < dim:
            aligned.append(t)
        t *= 2
    opts.extend(reversed(aligned))
    if not opts:
        opts.append(dim)          # cap smaller than alignment: use full extent
    return opts


def _plan_tiles(b, d_out, d_in, in_bytes, out_bytes, *, sub_align,
                tb_cap, tn_cap, tk_cap, budget_bytes):
    """Pick (tb, tn, tk, k_split) minimizing estimated HBM traffic under a VMEM budget."""
    best = None
    for tk in _tile_options(d_in, _LANE, tk_cap):
        k_split = tk < d_in
        k_tot = _round_up(d_in, tk) if k_split else d_in
        kb = _cdiv(k_tot, tk)
        for tn in _tile_options(d_out, _LANE, tn_cap):
            nb = _cdiv(d_out, tn)
            for tb in _tile_options(b, sub_align, tb_cap):
                mb = _cdiv(b, tb)
                ws = 2 * (tb + tn) * tk * in_bytes + 2 * tb * tn * out_bytes
                if k_split and out_bytes != 4:
                    ws += tb * tn * 4       # f32 accumulator scratch
                fits = ws <= budget_bytes
                # Pallas skips a DMA when a block index is unchanged between
                # consecutive grid steps, so the refetch factors are:
                x_fac = nb if kb > 1 else 1
                w_fac = mb if (nb > 1 or kb > 1) else 1
                traffic = (w_fac * d_out + x_fac * b) * k_tot * in_bytes \
                    + b * d_out * out_bytes
                steps = mb * nb * kb
                key = (0 if fits else 1, traffic, steps, -(tb * tn), ws)
                if best is None or key < best[1]:
                    best = ((tb, tn, tk, k_split), key)
    return best[0]


def _pwal_kernel(wf_ref, x_ref, w_ref, *rest, use_bias, act_name, k_split,
                 acc_in_out, precision):
    # wf_ref: (1,) f32 in SMEM
    # x_ref: (tb, tk), w_ref: (tn, tk), [b_ref: (1, tn)], o_ref: (tb, tn)
    if use_bias:
        b_ref = rest[0]
        rest = rest[1:]
    else:
        b_ref = None
    o_ref = rest[0]
    acc_ref = o_ref if acc_in_out else (rest[1] if len(rest) > 1 else None)

    def contract():
        # (tb, tk) x (tn, tk) contracted over d_in -> (tb, tn) on the MXU.
        return lax.dot_general(
            x_ref[...], w_ref[...],
            dimension_numbers=(((1,), (1,)), ((), ())),
            preferred_element_type=jnp.float32,
            precision=precision,
        )

    def epilogue(acc):
        out = acc * wf_ref[0]
        if use_bias:
            out = out + b_ref[...].astype(jnp.float32)   # (1, tn) broadcast over rows
        return _ACTS[act_name](out).astype(o_ref.dtype)

    if not k_split:
        # Whole reduction in one body: no accumulator round-trip, no branching.
        o_ref[...] = epilogue(contract())
        return

    k = pl.program_id(3)

    @pl.when(k == 0)
    def _():
        acc_ref[...] = jnp.zeros_like(acc_ref)

    acc_ref[...] += contract()

    @pl.when(k == pl.num_programs(3) - 1)
    def _():
        o_ref[...] = epilogue(acc_ref[...].astype(jnp.float32))


def parallel_weight_act_layer(
    x, weight, bias=None, *, weight_factor, act_name="identity",
    compute_dtype=None, precision=None,
    tb=512, tn=1024, tk=2048,
    vmem_budget_bytes=12 * 1024 * 1024, vmem_limit_bytes=None,
):
    """x: (P, B, d_in), weight: (P, d_out, d_in), bias: (P, d_out) or None.

    tb/tn/tk are *caps*; the planner picks the largest tiles fitting
    `vmem_budget_bytes` of double-buffered working set.
    """
    p, b, d_in = x.shape
    pw, d_out, d_in_w = weight.shape
    assert pw == p and d_in_w == d_in
    use_bias = bias is not None
    out_dtype = x.dtype

    if compute_dtype is not None:
        x = x.astype(compute_dtype)
        weight = weight.astype(compute_dtype)
    in_bytes = jnp.dtype(x.dtype).itemsize
    out_bytes = jnp.dtype(out_dtype).itemsize
    sub_align = {4: 8, 2: 16, 1: 32}.get(in_bytes, 8)

    tb_e, tn_e, tk_e, k_split = _plan_tiles(
        b, d_out, d_in, in_bytes, out_bytes, sub_align=sub_align,
        tb_cap=tb, tn_cap=tn, tk_cap=tk, budget_bytes=vmem_budget_bytes)

    # Only the contraction (K) dim needs explicit zero padding (and only when K
    # is split).  B / d_out edge blocks are handled by Pallas: garbage from
    # padded reads is confined to rows/cols that are masked on output write.
    if k_split:
        k_pad = _round_up(d_in, tk_e)
        if k_pad != d_in:
            x = jnp.pad(x, ((0, 0), (0, 0), (0, k_pad - d_in)))
            weight = jnp.pad(weight, ((0, 0), (0, 0), (0, k_pad - d_in)))
    else:
        k_pad = d_in

    wf = jnp.asarray(weight_factor, dtype=jnp.float32).reshape(1)
    acc_in_out = (out_dtype == jnp.float32)

    mb, nb, kb = _cdiv(b, tb_e), _cdiv(d_out, tn_e), k_pad // tk_e

    if k_split:
        grid = (p, mb, nb, kb)
        x_map = lambda i, m, n, k: (i, m, k)
        w_map = lambda i, m, n, k: (i, n, k)
        bias_map = lambda i, m, n, k: (i, 0, n)
        o_map = lambda i, m, n, k: (i, m, n)
        dims = ("parallel", "parallel", "parallel", "arbitrary")
    else:
        grid = (p, mb, nb)
        x_map = lambda i, m, n: (i, m, 0)
        w_map = lambda i, m, n: (i, n, 0)
        bias_map = lambda i, m, n: (i, 0, n)
        o_map = lambda i, m, n: (i, m, n)
        dims = ("parallel", "parallel", "parallel")

    in_specs = [
        pl.BlockSpec(memory_space=pltpu.MemorySpace.SMEM),         # weight_factor
        pl.BlockSpec((None, tb_e, tk_e), x_map),                   # x
        pl.BlockSpec((None, tn_e, tk_e), w_map),                   # weight
    ]
    args = [wf, x, weight]
    if use_bias:
        in_specs.append(pl.BlockSpec((None, 1, tn_e), bias_map))
        args.append(bias.reshape(p, 1, d_out))

    scratch_shapes = []
    if k_split and not acc_in_out:
        scratch_shapes.append(pltpu.VMEM((tb_e, tn_e), jnp.float32))

    kernel = functools.partial(
        _pwal_kernel, use_bias=use_bias, act_name=act_name, k_split=k_split,
        acc_in_out=acc_in_out, precision=precision)

    out = pl.pallas_call(
        kernel,
        out_shape=jax.ShapeDtypeStruct((p, b, d_out), out_dtype),
        grid_spec=pltpu.PrefetchScalarGridSpec(
            num_scalar_prefetch=0,
            grid=grid,
            in_specs=in_specs,
            out_specs=pl.BlockSpec((None, tb_e, tn_e), o_map),
            scratch_shapes=scratch_shapes,
        ),
        compiler_params=pltpu.CompilerParams(
            dimension_semantics=dims,
            vmem_limit_bytes=vmem_limit_bytes,
        ),
    )(*args)
    return out


def _reference(x, weight, bias, *, weight_factor, act_name):
    out = weight_factor * jnp.einsum("pbi,poi->pbo",
                                     x.astype(jnp.float32),
                                     weight.astype(jnp.float32))
    if bias is not None:
        out = out + bias[:, None, :].astype(jnp.float32)
    return _ACTS[act_name](out)


if __name__ == "__main__":
    key = jax.random.PRNGKey(0)
    k1, k2, k3, k4, k5, k6 = jax.random.split(key, 6)
    act_name = "tanh"

    # --- Small shapes consistent with the module (full-K / weight-resident path).
    n_parallel, batch, d_in, d_out = 2, 8, 32, 32
    weight_factor = 1.0 / math.sqrt(d_in)
    x = jax.random.normal(k1, (n_parallel, batch, d_in), dtype=jnp.float32)
    w = jax.random.normal(k2, (n_parallel, d_out, d_in), dtype=jnp.float32)
    bias = 0.1 * jax.random.normal(k3, (n_parallel, d_out), dtype=jnp.float32)

    out = jax.block_until_ready(parallel_weight_act_layer(
        x, w, bias, weight_factor=weight_factor, act_name=act_name))
    ref = _reference(x, w, bias, weight_factor=weight_factor, act_name=act_name)
    assert out.shape == (n_parallel, batch, d_out)
    assert jnp.allclose(out, ref, atol=1e-5, rtol=1e-5), "bias path mismatch"

    out_nb = jax.block_until_ready(parallel_weight_act_layer(
        x, w, None, weight_factor=weight_factor, act_name=act_name))
    ref_nb = _reference(x, w, None, weight_factor=weight_factor, act_name=act_name)
    assert jnp.allclose(out_nb, ref_nb, atol=1e-5, rtol=1e-5), "no-bias path mismatch"

    # --- Forced split-K + unaligned B/d_out (edge-block masking, acc-in-output path).
    p2, b2, di2, do2 = 2, 12, 256, 160
    wf2 = 1.0 / math.sqrt(di2)
    x2 = jax.random.normal(k4, (p2, b2, di2), dtype=jnp.float32)
    w2 = jax.random.normal(k5, (p2, do2, di2), dtype=jnp.float32)
    bias2 = 0.1 * jax.random.normal(k6, (p2, do2), dtype=jnp.float32)
    out2 = jax.block_until_ready(parallel_weight_act_layer(
        x2, w2, bias2, weight_factor=wf2, act_name=act_name, tb=8, tn=128, tk=128))
    ref2 = _reference(x2, w2, bias2, weight_factor=wf2, act_name=act_name)
    assert out2.shape == (p2, b2, do2)
    assert jnp.allclose(out2, ref2, atol=1e-4, rtol=1e-4), "split-K path mismatch"

    # --- bf16 MXU operands (f32 accumulation, f32 output), full-K path.
    out_bf = jax.block_until_ready(parallel_weight_act_layer(
        x, w, bias, weight_factor=weight_factor, act_name=act_name,
        compute_dtype=jnp.bfloat16))
    assert out_bf.dtype == jnp.float32
    assert jnp.allclose(out_bf, ref, atol=1e-1, rtol=1e-1), "bf16 compute mismatch"

    # --- bf16 in/out with split K (f32 scratch accumulator path).
    x2b, w2b, b2b = (x2.astype(jnp.bfloat16), w2.astype(jnp.bfloat16),
                     bias2.astype(jnp.bfloat16))
    out3 = jax.block_until_ready(parallel_weight_act_layer(
        x2b, w2b, b2b, weight_factor=wf2, act_name=act_name, tb=8, tn=128, tk=128))
    ref3 = _reference(x2b, w2b, b2b, weight_factor=wf2, act_name=act_name)
    assert out3.dtype == jnp.bfloat16
    assert jnp.allclose(out3.astype(jnp.float32), ref3, atol=1e-1, rtol=1e-1), \
        "bf16 split-K mismatch"

    print("KERNEL_OK")
</pallas_src>

<mosaic_0001>
module attributes {stable_mosaic.version = 11 : i64} {
  func.func @_pwal_kernel(%arg0: i32, %arg1: i32, %arg2: i32, %arg3: memref<1xf32, #tpu.memory_space<smem>>, %arg4: memref<1x8x32xf32, #tpu.memory_space<vmem>>, %arg5: memref<1x32x32xf32, #tpu.memory_space<vmem>>, %arg6: memref<1x1x32xf32, #tpu.memory_space<vmem>>, %arg7: memref<1x8x32xf32, #tpu.memory_space<vmem>>) attributes {dimension_semantics = [#tpu.dimension_semantics<parallel>, #tpu.dimension_semantics<parallel>, #tpu.dimension_semantics<parallel>], iteration_bounds = array<i64: 2, 1, 1>, scalar_prefetch = 0 : i64, scratch_operands = 0 : i64, tpu.core_type = #tpu.core_type<tc>, window_params = [{transform_indices = @transform_0, window_bounds = array<i64: 1>}, {transform_indices = @transform_1, window_bounds = array<i64: 1, 8, 32>}, {transform_indices = @transform_2, window_bounds = array<i64: 1, 32, 32>}, {transform_indices = @transform_3, window_bounds = array<i64: 1, 1, 32>}, {transform_indices = @transform_4, window_bounds = array<i64: 1, 8, 32>}]} {
    %c0 = arith.constant 0 : index
    %c0_0 = arith.constant 0 : index
    %c0_1 = arith.constant 0 : index
    %0 = vector.load %arg4[%c0, %c0_0, %c0_1] : memref<1x8x32xf32, #tpu.memory_space<vmem>>, vector<1x8x32xf32>
    %1 = vector.shape_cast %0 : vector<1x8x32xf32> to vector<8x32xf32>
    %c0_2 = arith.constant 0 : index
    %c0_3 = arith.constant 0 : index
    %c0_4 = arith.constant 0 : index
    %2 = vector.load %arg5[%c0_2, %c0_3, %c0_4] : memref<1x32x32xf32, #tpu.memory_space<vmem>>, vector<1x32x32xf32>
    %3 = vector.shape_cast %2 : vector<1x32x32xf32> to vector<32x32xf32>
    %cst = arith.constant dense<0.000000e+00> : vector<8x32xf32>
    %4 = tpu.matmul %1, %3, %cst {dimension_numbers = #tpu.dot_dimension_numbers<[1], [1], [0], [0], [0, 0, 1, 0], [], []>} : vector<8x32xf32>, vector<32x32xf32>, vector<8x32xf32> -> vector<8x32xf32>
    %c0_5 = arith.constant 0 : index
    %5 = memref.load %arg3[%c0_5] : memref<1xf32, #tpu.memory_space<smem>>
    %6 = vector.broadcast %5 : f32 to vector<8x32xf32>
    %7 = arith.mulf %4, %6 : vector<8x32xf32>
    %c0_6 = arith.constant 0 : index
    %c0_7 = arith.constant 0 : index
    %c0_8 = arith.constant 0 : index
    %8 = vector.load %arg6[%c0_6, %c0_7, %c0_8] : memref<1x1x32xf32, #tpu.memory_space<vmem>>, vector<1x1x32xf32>
    %9 = vector.shape_cast %8 : vector<1x1x32xf32> to vector<1x32xf32>
    %10 = vector.broadcast %9 : vector<1x32xf32> to vector<8x32xf32>
    %11 = arith.addf %7, %10 : vector<8x32xf32>
    %12 = math.tanh %11 : vector<8x32xf32>
    %c0_9 = arith.constant 0 : index
    %c0_10 = arith.constant 0 : index
    %c0_11 = arith.constant 0 : index
    %13 = vector.load %arg7[%c0_9, %c0_10, %c0_11] : memref<1x8x32xf32, #tpu.memory_space<vmem>>, vector<1x8x32xf32>
    %14 = vector.shape_cast %13 : vector<1x8x32xf32> to vector<8x32xf32>
    %15 = vector.shape_cast %12 : vector<8x32xf32> to vector<1x8x32xf32>
    tpu.vector_store %arg7[%c0_9, %c0_10, %c0_11], %15 {strides = array<i32>} : memref<1x8x32xf32, #tpu.memory_space<vmem>>, vector<1x8x32xf32>,
    return
  }
  func.func @transform_0(%arg0: i32, %arg1: i32, %arg2: i32) -> i32 {
    %c0_i32 = arith.constant 0 : i32
    %c0_i32_0 = arith.constant 0 : i32
    return %c0_i32 : i32
  }
  func.func @transform_1(%arg0: i32, %arg1: i32, %arg2: i32) -> (i32, i32, i32) {
    %c0_i32 = arith.constant 0 : i32
    %c0_i32_0 = arith.constant 0 : i32
    return %arg0, %arg1, %c0_i32 : i32, i32, i32
  }
  func.func @transform_2(%arg0: i32, %arg1: i32, %arg2: i32) -> (i32, i32, i32) {
    %c0_i32 = arith.constant 0 : i32
    %c0_i32_0 = arith.constant 0 : i32
    return %arg0, %arg2, %c0_i32 : i32, i32, i32
  }
  func.func @transform_3(%arg0: i32, %arg1: i32, %arg2: i32) -> (i32, i32, i32) {
    %c0_i32 = arith.constant 0 : i32
    %c0_i32_0 = arith.constant 0 : i32
    return %arg0, %c0_i32, %arg2 : i32, i32, i32
  }
  func.func @transform_4(%arg0: i32, %arg1: i32, %arg2: i32) -> (i32, i32, i32) {
    %c0_i32 = arith.constant 0 : i32
    return %arg0, %arg1, %arg2 : i32, i32, i32
  }
}

</mosaic_0001>

<llo_original>
// kernel: tpu_custom_call.1
$region0: #{tpu_custom_call.1}
  #allocation0 [shape = 'u32[]', space=smem, size = 0x4, offset = 0x4, fixed_abs, tag = 'smem constant byte address 0x4 - core index']
  #allocation1 [shape = 'u32[144,128]{1,0:T(1,128)}', space=vmem, size = 0x12000, scoped, tag = 'internal scratch']
  #allocation2 [shape = 'f32[1]{0:T(128)S(6)}', space=smem, size = 0x200, scoped, tag = 'scoped memory for tpu_custom_call.1']
  %s0 = inlined_call_operand.<no memory space> [shape: f32[1], index: 0, kind: input, shape index: {}]
  %s1 = inlined_call_operand.hbm [shape: f32[2,8,32], index: 1, kind: input, shape index: {}]
  %s2 = inlined_call_operand.hbm [shape: f32[2,32,32], index: 2, kind: input, shape index: {}]
  %s3 = inlined_call_operand.vmem [shape: f32[2,1,32], index: 3, kind: input, shape index: {}]
  %s4 = inlined_call_operand.hbm [shape: f32[2,8,32], index: 4, kind: output, shape index: {}]
  %s5 = sld [smem:[#allocation0]]
  $region57: #{tpu_custom_call.1} parent=0
    _
  %s7 = ssub.s32 1, %s5
  %s8 = scalar_select 0, %s7, %s5
  %9 = sst [smem:[#allocation2]] %s0
  $region1: #{tpu_custom_call.1} parent=0
    #allocation3 [shape = 'u8[8192]{0}', space=vmem, size = 0x2000, scoped, tag = 'input window, operand 1']
    #allocation4 [shape = 's32[2]{0}', space=sflag, size = 0x8, scoped, tag = 'scoped memory for tpu_custom_call.1']
    #allocation5 [shape = 's32[2]{0}', space=sflag, size = 0x8, scoped, tag = 'scoped memory for tpu_custom_call.1']
    #allocation6 [shape = 'u8[32768]{0}', space=vmem, size = 0x8000, scoped, tag = 'input window, operand 2']
    #allocation7 [shape = 's32[2]{0}', space=sflag, size = 0x8, scoped, tag = 'scoped memory for tpu_custom_call.1']
    #allocation8 [shape = 'u8[8192]{0}', space=vmem, size = 0x2000, scoped, tag = 'output window, operand 0']
    %10 = vsyncpa [#allocation4], 0
    %s11 = scalar_lea.sflag [#allocation4], 1
    %12 = vsyncpa %s11, 0
    %13 = vsyncpa [#allocation7], 0
    %s14 = scalar_lea.sflag [#allocation7], 1
    %15 = vsyncpa %s14, 0
    %16 = vsyncpa [#allocation5], 0
    %s17 = scalar_lea.sflag [#allocation5], 1
    %18 = vsyncpa %s17, 0
    loop: start=0, step=1, limit=4
    $region2: #{tpu_custom_call.1} parent=1 // loop_pre_header
      _
    $region3: #{tpu_custom_call.1} parent=1 // loop_header
      %s20 = sphi 0, %s24
      %p21 = scmp.ge.s32.totalorder %s20, 4
      %s27 = sphi 0, %s46
      %s28 = sphi 0, %s42
      %s29 = sphi 0, %s38
      %s30 = sphi 0, %s27
      %s31 = sphi 0, %s28
      %s32 = sphi 0, %s29
      %s33 = sphi 0, %s30
      %s34 = sphi 0, %s31
      %s35 = sphi 0, %s32
      %s47 = sphi 0, %s47
      %s49 = sphi 0, %s47
      %s50 = sphi 0, %s49
      %s64 = sphi 0, %s50
      %s72 = sphi 0, %s74
      %s75 = sphi 0, %s72
      %s76 = sphi 0, %s75
      %s92 = sphi 0, %s76
      %s100 = sphi 0, %s102
      %s103 = sphi 0, %s100
      %s104 = sphi 0, %s103
      %s120 = sphi 0, %s104
      %s128 = sphi 0, %s130
      %s131 = sphi 0, %s128
      %s132 = sphi 0, %s131
      %s148 = sphi 0, %s132
      %s158 = sphi 0, %s160
      %s161 = sphi 0, %s158
      %s162 = sphi 0, %s161
      %s178 = sphi 0, %s162
    $region4: #{tpu_custom_call.1} parent=1 // loop_header_branch
      %23 = sbr.rel (%p21) target = $region8
    $region5: #{tpu_custom_call.1} parent=1 // loop_body
      %s25 = ssub.s32 %s20, 1
      %s26 = ssub.s32 %s20, 2
      %s36 = sadd.s32 1, %s29
      %p37 = scmp.ge.s32.totalorder %s36, 1
      %s38 = scalar_select %p37, 0, %s36
      %s39 = sadd.s32 1, %s28
      %s40 = scalar_select %p37, %s39, %s28
      %p41 = scmp.ge.s32.totalorder %s40, 1
      %s42 = scalar_select %p41, 0, %s40
      %s43 = sadd.s32 1, %s27
      %s44 = scalar_select %p41, %s43, %s27
      %p45 = scmp.ge.s32.totalorder %s44, 2
      %s46 = scalar_select %p45, 0, %s44
      %s48 = sadd.s32 %s47, 1
      %p51 = scmp.eq.s32.totalorder %s20, 1
      %p52 = scmp.ne.s32.totalorder %s47, %s49
      %p53 = scmp.eq.s32.totalorder %s20, 0
      %p54 = por %p52, %p53
      %p55 = scmp.ne.s32.totalorder %s47, %s49
      %p56 = scmp.eq.s32.totalorder %s25, 1
      %p57 = por %p55, %p56
      %p58 = scmp.ne.s32.totalorder %s49, %s50
      %p59 = scmp.eq.s32.totalorder %s25, 0
      %p60 = por %p58, %p59
      %p61 = scmp.ne.s32.totalorder %s49, %s50
      %p62 = scmp.eq.s32.totalorder %s26, 1
      %p63 = por %p61, %p62
      %p65 = scmp.ne.s32.totalorder %s50, %s64
      %p66 = scmp.eq.s32.totalorder %s26, 0
      %p67 = por %p65, %p66
      %s68 = ssub.s32 %s27, %s46
      %s69 = ssub.s32 %s28, %s42
      %s70 = sor.u32 %s68, %s69
      %p71 = scmp.eq.s32.totalorder %s70, 0
      %s73 = sadd.s32 %s72, 1
      %s74 = scalar_select %p71, %s72, %s73
      %p77 = pneg %p71
      %p78 = scmp.eq.s32.totalorder %s20, 1
      %p79 = por %p77, %p78
      %p80 = scmp.ne.s32.totalorder %s72, %s75
      %p81 = scmp.eq.s32.totalorder %s20, 0
      %p82 = por %p80, %p81
      %p83 = scmp.ne.s32.totalorder %s72, %s75
      %p84 = scmp.eq.s32.totalorder %s25, 1
      %p85 = por %p83, %p84
      %p86 = scmp.ne.s32.totalorder %s75, %s76
      %p87 = scmp.eq.s32.totalorder %s25, 0
      %p88 = por %p86, %p87
      %p89 = scmp.ne.s32.totalorder %s75, %s76
      %p90 = scmp.eq.s32.totalorder %s26, 1
      %p91 = por %p89, %p90
      %p93 = scmp.ne.s32.totalorder %s76, %s92
      %p94 = scmp.eq.s32.totalorder %s26, 0
      %p95 = por %p93, %p94
      %s96 = ssub.s32 %s27, %s46
      %s97 = ssub.s32 %s29, %s38
      %s98 = sor.u32 %s96, %s97
      %p99 = scmp.eq.s32.totalorder %s98, 0
      %s101 = sadd.s32 %s100, 1
      %s102 = scalar_select %p99, %s100, %s101
      %p105 = pneg %p99
      %p106 = scmp.eq.s32.totalorder %s20, 1
      %p107 = por %p105, %p106
      %p108 = scmp.ne.s32.totalorder %s100, %s103
      %p109 = scmp.eq.s32.totalorder %s20, 0
      %p110 = por %p108, %p109
      %p111 = scmp.ne.s32.totalorder %s100, %s103
      %p112 = scmp.eq.s32.totalorder %s25, 1
      %p113 = por %p111, %p112
      %p114 = scmp.ne.s32.totalorder %s103, %s104
      %p115 = scmp.eq.s32.totalorder %s25, 0
      %p116 = por %p114, %p115
      %p117 = scmp.ne.s32.totalorder %s103, %s104
      %p118 = scmp.eq.s32.totalorder %s26, 1
      %p119 = por %p117, %p118
      %p121 = scmp.ne.s32.totalorder %s104, %s120
      %p122 = scmp.eq.s32.totalorder %s26, 0
      %p123 = por %p121, %p122
      %s124 = ssub.s32 %s27, %s46
      %s125 = ssub.s32 %s29, %s38
      %s126 = sor.u32 %s124, %s125
      %p127 = scmp.eq.s32.totalorder %s126, 0
      %s129 = sadd.s32 %s128, 1
      %s130 = scalar_select %p127, %s128, %s129
      %p133 = pneg %p127
      %p134 = scmp.eq.s32.totalorder %s20, 1
      %p135 = por %p133, %p134
      %p136 = scmp.ne.s32.totalorder %s128, %s131
      %p137 = scmp.eq.s32.totalorder %s20, 0
      %p138 = por %p136, %p137
      %p139 = scmp.ne.s32.totalorder %s128, %s131
      %p140 = scmp.eq.s32.totalorder %s25, 1
      %p141 = por %p139, %p140
      %p142 = scmp.ne.s32.totalorder %s131, %s132
      %p143 = scmp.eq.s32.totalorder %s25, 0
      %p144 = por %p142, %p143
      %p145 = scmp.ne.s32.totalorder %s131, %s132
      %p146 = scmp.eq.s32.totalorder %s26, 1
      %p147 = por %p145, %p146
      %p149 = scmp.ne.s32.totalorder %s132, %s148
      %p150 = scmp.eq.s32.totalorder %s26, 0
      %p151 = por %p149, %p150
      %s152 = ssub.s32 %s27, %s46
      %s153 = ssub.s32 %s28, %s42
      %s154 = sor.u32 %s152, %s153
      %s155 = ssub.s32 %s29, %s38
      %s156 = sor.u32 %s154, %s155
      %p157 = scmp.eq.s32.totalorder %s156, 0
      %s159 = sadd.s32 %s158, 1
      %s160 = scalar_select %p157, %s158, %s159
      %p163 = pneg %p157
      %p164 = scmp.eq.s32.totalorder %s20, 1
      %p165 = por %p163, %p164
      %p166 = scmp.ne.s32.totalorder %s158, %s161
      %p167 = scmp.eq.s32.totalorder %s20, 0
      %p168 = por %p166, %p167
      %p169 = scmp.ne.s32.totalorder %s158, %s161
      %p170 = scmp.eq.s32.totalorder %s25, 1
      %p171 = por %p169, %p170
      %p172 = scmp.ne.s32.totalorder %s161, %s162
      %p173 = scmp.eq.s32.totalorder %s25, 0
      %p174 = por %p172, %p173
      %p175 = scmp.ne.s32.totalorder %s161, %s162
      %p176 = scmp.eq.s32.totalorder %s26, 1
      %p177 = por %p175, %p176
      %p179 = scmp.ne.s32.totalorder %s162, %s178
      %p180 = scmp.eq.s32.totalorder %s26, 0
      %p181 = por %p179, %p180
      %p182 = scmp.le.s32.totalorder 1, %s20
      %p183 = scmp.lt.s32.totalorder %s20, 3
      %p184 = pnand %p182, %p183
      %p185 = pneg %p184
      // Predicated region
      $region9: #{tpu_custom_call.1} parent=5 // pred_check
        _
      $region10: #{tpu_custom_call.1} parent=5 // pred_check_branch
        %187 = sbr.rel (%p184) target = $region12
      $region11: #{tpu_custom_call.1} parent=5 // pred_region
        %s188 = ssub.s32 %s20, 1
        // Predicated region
        $region13: #{tpu_custom_call.1} parent=11 // pred_check
          %p189 = pneg %p60
        $region14: #{tpu_custom_call.1} parent=11 // pred_check_branch
          %191 = sbr.rel (%p189) target = $region16
        $region15: #{tpu_custom_call.1} parent=11 // pred_region
          _
        $region16: #{tpu_custom_call.1} parent=11 // pred_fallthru
          _
      $region12: #{tpu_custom_call.1} parent=5 // pred_fallthru
        _
      %p192 = scmp.lt.s32.totalorder %s20, 2
      // Predicated region
      $region17: #{tpu_custom_call.1} parent=5 // pred_check
        %p193 = pneg %p192
      $region18: #{tpu_custom_call.1} parent=5 // pred_check_branch
        %195 = sbr.rel (%p193) target = $region20
      $region19: #{tpu_custom_call.1} parent=5 // pred_region
        // Predicated region
        $region21: #{tpu_custom_call.1} parent=19 // pred_check
          %p196 = pneg %p82
        $region22: #{tpu_custom_call.1} parent=19 // pred_check_branch
          %198 = sbr.rel (%p196) target = $region24
        $region23: #{tpu_custom_call.1} parent=19 // pred_region
          %s199 = sand.u32 %s72, 1
          %s200 = scalar_lea.sflag [#allocation4], %s199
          %s201 = sand.u32 %s72, 1
          %s202 = smul.addr %s201, 8
          %s203 = scalar_lea.vmem [#allocation3], %s202
          %s205 = ssub.s32 128, 128
          %206 = vsyncadd %s200, %s205
          %s207 = sadd.s32 %s28, %s27
          %s208 = smul.addr %s207, 128
          %s209 = scalar_lea.hbm %s1, %s208
          %s211 = sshll.u32 %s203, 4
          %s212 = int_to_ptr.vmem [resolvable:$true] %s211
          %214 = dma.hbm_to_vmem [thread:$0]  %s209, 128, %s212, %s200
        $region24: #{tpu_custom_call.1} parent=19 // pred_fallthru
          _
        // Predicated region
        $region25: #{tpu_custom_call.1} parent=19 // pred_check
          %p215 = pneg %p110
        $region26: #{tpu_custom_call.1} parent=19 // pred_check_branch
          %217 = sbr.rel (%p215) target = $region28
        $region27: #{tpu_custom_call.1} parent=19 // pred_region
          %s218 = sand.u32 %s100, 1
          %s219 = scalar_lea.sflag [#allocation7], %s218
          %s220 = sand.u32 %s100, 1
          %s221 = smul.addr %s220, 32
          %s222 = scalar_lea.vmem [#allocation6], %s221
          %s223 = smul.u32 4, %s29
          %s225 = ssub.s32 512, 512
          %226 = vsyncadd %s219, %s225
          %s227 = smul.addr %s27, 4
          %s228 = sadd.s32 %s223, %s227
          %s229 = smul.addr %s228, 128
          %s230 = scalar_lea.hbm %s2, %s229
          %s231 = sshll.u32 %s222, 4
          %s232 = int_to_ptr.vmem [resolvable:$true] %s231
          %237 = dma.hbm_to_vmem [thread:$0]  %s230, 512, %s232, %s219, 128, 128, 8
        $region28: #{tpu_custom_call.1} parent=19 // pred_fallthru
          _
        // Predicated region
        $region29: #{tpu_custom_call.1} parent=19 // pred_check
          %p238 = pneg %p138
        $region30: #{tpu_custom_call.1} parent=19 // pred_check_branch
          %240 = sbr.rel (%p238) target = $region32
        $region31: #{tpu_custom_call.1} parent=19 // pred_region
          %p241 = scmp.lt.s32.totalorder %s27, 1
          %s242 = scalar_select %p241, %s27, 1
          %p243 = scmp.lt.s32.totalorder %s29, 0
          %s244 = scalar_select %p243, %s29, 0
          %s245 = sadd.s32 %s244, %s242
          %s246 = scalar_lea.vmem %s3, %s245
        $region32: #{tpu_custom_call.1} parent=19 // pred_fallthru
          _
      $region20: #{tpu_custom_call.1} parent=5 // pred_fallthru
        _
      %p247 = scmp.le.s32.totalorder 1, %s20
      %p248 = scmp.lt.s32.totalorder %s20, 3
      %p249 = pnand %p247, %p248
      %p250 = pneg %p249
      // Predicated region
      $region33: #{tpu_custom_call.1} parent=5 // pred_check
        _
      $region34: #{tpu_custom_call.1} parent=5 // pred_check_branch
        %252 = sbr.rel (%p249) target = $region36
      $region35: #{tpu_custom_call.1} parent=5 // pred_region
        %s253 = ssub.s32 %s20, 1
        %s254 = sand.u32 %s75, 1
        %s255 = scalar_lea.sflag [#allocation4], %s254
        %s256 = sand.u32 %s75, 1
        %s257 = smul.addr %s256, 8
        %s258 = scalar_lea.vmem [#allocation3], %s257
        // Predicated region
        $region37: #{tpu_custom_call.1} parent=35 // pred_check
          %p259 = pneg %p88
        $region38: #{tpu_custom_call.1} parent=35 // pred_check_branch
          %261 = sbr.rel (%p259) target = $region40
        $region39: #{tpu_custom_call.1} parent=35 // pred_region
          %262 = dma.done %s255, 128
        $region40: #{tpu_custom_call.1} parent=35 // pred_fallthru
          _
        %s263 = sand.u32 %s103, 1
        %s264 = scalar_lea.sflag [#allocation7], %s263
        %s265 = sand.u32 %s103, 1
        %s266 = smul.addr %s265, 32
        %s267 = scalar_lea.vmem [#allocation6], %s266
        // Predicated region
        $region41: #{tpu_custom_call.1} parent=35 // pred_check
          %p268 = pneg %p116
        $region42: #{tpu_custom_call.1} parent=35 // pred_check_branch
          %270 = sbr.rel (%p268) target = $region44
        $region43: #{tpu_custom_call.1} parent=35 // pred_region
          %271 = dma.done %s264, 512
        $region44: #{tpu_custom_call.1} parent=35 // pred_fallthru
          _
        %p272 = pneg %p60
        %p273 = pneg %p57
        %s274 = sand.u32 %s75, 1
        %s275 = scalar_lea.sflag [#allocation4], %s274
        %s276 = sand.u32 %s75, 1
        %s277 = smul.addr %s276, 8
        %s278 = scalar_lea.vmem [#allocation3], %s277
        %p279 = pneg %p88
        %p280 = pneg %p85
        %s281 = sand.u32 %s103, 1
        %s282 = scalar_lea.sflag [#allocation7], %s281
        %s283 = sand.u32 %s103, 1
        %s284 = smul.addr %s283, 32
        %s285 = scalar_lea.vmem [#allocation6], %s284
        %p286 = pneg %p116
        %p287 = pneg %p113
        %p288 = scmp.lt.s32.totalorder %s30, 1
        %s289 = scalar_select %p288, %s30, 1
        %p290 = scmp.lt.s32.totalorder %s32, 0
        %s291 = scalar_select %p290, %s32, 0
        %s292 = sadd.s32 %s291, %s289
        %s293 = scalar_lea.vmem %s3, %s292
        %p294 = pneg %p144
        %p295 = pneg %p141
        %p296 = pneg %p174
        %p297 = pneg %p171
        %s298 = sand.u32 %s161, 1
        %s299 = scalar_lea.sflag [#allocation5], %s298
        %s300 = sand.u32 %s161, 1
        %s301 = smul.addr %s300, 8
        %s302 = scalar_lea.vmem [#allocation8], %s301
        %s303 = smul.u32 4, %s32
        %p304 = scmp.lt.s32.totalorder %s30, 1
        %s305 = scalar_select %p304, %s30, 1
        %p306 = scmp.lt.s32.totalorder %s32, 0
        %s307 = scalar_select %p306, %s32, 0
        %s308 = sadd.s32 %s307, %s305
        %s309 = scalar_lea.vmem %s3, %s308
        %v310 = vld [vmem:[%s258] sm:$0xff]
        %v311 = vld [vmem:[%s267] sm:$0xff]
        %v312 = vld [vmem:[%s267 + $0x8] sm:$0xff]
        %v313 = vld [vmem:[%s267 + $0x10] sm:$0xff]
        %v314 = vld [vmem:[%s267 + $0x18] sm:$0xff]
        %vm315 = vcmask 261120
        %v317 = vsel %vm315, %v310, 0
        %v320 = vsel %vm315, %v311, 0
        %v323 = vsel %vm315, %v312, 0
        %v326 = vsel %vm315, %v313, 0
        %v329 = vsel %vm315, %v314, 0
        %331 = vmatprep.subr.mxu0 0.0
        %332 = vmatpush1.xpose.msra.mxu0 %v320
        %333 = vmatprep.subr.mxu0 0.0
        %334 = vmatpush1.xpose.msra.mxu0 %v323
        %335 = vmatprep.subr.mxu0 0.0
        %336 = vmatpush1.xpose.msra.mxu0 %v326
        %337 = vmatprep.subr.mxu0 0.0
        %338 = vmatpush1.xpose.msra.mxu0 %v329
        %339 = vmatprep.subr.mxu0 0.0
        %340 = vmatpush1.xpose.msra.mxu0 0.0
        %341 = vmatprep.subr.mxu0 0.0
        %342 = vmatpush1.xpose.msra.mxu0 0.0
        %343 = vmatprep.subr.mxu0 0.0
        %344 = vmatpush1.xpose.msra.mxu0 0.0
        %345 = vmatprep.subr.mxu0 0.0
        %346 = vmatpush1.xpose.msra.mxu0 0.0
        %347 = vmatprep.subr.mxu0 0.0
        %348 = vmatpush1.xpose.msra.mxu0 0.0
        %349 = vmatprep.subr.mxu0 0.0
        %350 = vmatpush1.xpose.msra.mxu0 0.0
        %351 = vmatprep.subr.mxu0 0.0
        %352 = vmatpush1.xpose.msra.mxu0 0.0
        %353 = vmatprep.subr.mxu0 0.0
        %354 = vmatpush1.xpose.msra.mxu0 0.0
        %355 = vmatprep.subr.mxu0 0.0
        %356 = vmatpush1.xpose.msra.mxu0 0.0
        %357 = vmatprep.subr.mxu0 0.0
        %358 = vmatpush1.xpose.msra.mxu0 0.0
        %359 = vmatprep.subr.mxu0 0.0
        %360 = vmatpush1.xpose.msra.mxu0 0.0
        %361 = vmatprep.subr.mxu0 0.0
        %362 = vmatpush1.xpose.msra.mxu0 0.0
        %363 = vmatprep.subr.mxu0 0.0
        %364 = vmatpush1.xpose.msra.mxu0 0.0
        %365 = vmatprep.subr.mxu0 0.0
        %366 = vmatpush1.xpose.msra.mxu0 0.0
        %367 = vmatprep.subr.mxu0 0.0
        %368 = vmatpush1.xpose.msra.mxu0 0.0
        %369 = vmatprep.subr.mxu0 0.0
        %370 = vmatpush1.xpose.msra.mxu0 0.0
        %371 = vmatprep.subr.mxu0 0.0
        %372 = vmatpush1.xpose.msra.mxu0 0.0
        %373 = vmatprep.subr.mxu0 0.0
        %374 = vmatpush1.xpose.msra.mxu0 0.0
        %375 = vmatprep.subr.mxu0 0.0
        %376 = vmatpush1.xpose.msra.mxu0 0.0
        %377 = vmatprep.subr.mxu0 0.0
        %378 = vmatpush1.xpose.msra.mxu0 0.0
        %379 = vmatprep.subr.mxu0 0.0
        %380 = vmatpush1.xpose.msra.mxu0 0.0
        %381 = vmatprep.subr.mxu0 0.0
        %382 = vmatpush1.xpose.msra.mxu0 0.0
        %383 = vmatprep.subr.mxu0 0.0
        %384 = vmatpush1.xpose.msra.mxu0 0.0
        %385 = vmatprep.subr.mxu0 0.0
        %386 = vmatpush1.xpose.msra.mxu0 0.0
        %387 = vmatprep.subr.mxu0 0.0
        %388 = vmatpush1.xpose.msra.mxu0 0.0
        %389 = vmatprep.subr.mxu0 0.0
        %390 = vmatpush1.xpose.msra.mxu0 0.0
        %391 = vmatprep.subr.mxu0 0.0
        %392 = vmatpush1.xpose.msra.mxu0 0.0
        %393 = vmatprep.subr.mxu0 0.0
        %394 = vmatpush1.xpose.msra.mxu0 0.0
        %395 = vmatprep.mubr.f32.mxu0 0.0
        %396 = vmatmul.mubr.f32.gmra.mrb[0].mxu0 %v317
        %v397 = vpop.f32.mrb[0].mxu0
        %v398 = vadd.f32 0.0, %v397
        %v399 = vpop.f32.mrb[0].mxu0
        %400 = vdwg.mxu0
        %s401 = sld [smem:[#allocation2]]
        %v402 = vstv %s401
        %v403 = vmul.f32 %v398, %v402
        %v404 = vld [vmem:[%s309] sm:$0x1]
        %v406 = vlaneseq
        %v407 = vshrl.u32 %v406, 7
        %v408 = vsub.s32 0, %v407
        %v409 = vrot.slane %v404, %v408
        %v411 = vadd.f32 %v403, %v409
        %v412 = vtanh.pop %v411
        %413 = vst.msk [vmem:[%s302] sm:$0xff] %vm315, %v412
        %s414 = sand.u32 %s161, 1
        %s415 = scalar_lea.sflag [#allocation5], %s414
        %s416 = sand.u32 %s161, 1
        %s417 = smul.addr %s416, 8
        %s418 = scalar_lea.vmem [#allocation8], %s417
        // Predicated region
        $region45: #{tpu_custom_call.1} parent=35 // pred_check
          %p419 = pneg %p171
        $region46: #{tpu_custom_call.1} parent=35 // pred_check_branch
          %421 = sbr.rel (%p419) target = $region48
        $region47: #{tpu_custom_call.1} parent=35 // pred_region
          %s423 = ssub.s32 128, 128
          %424 = vsyncadd %s415, %s423
          %s425 = sadd.s32 %s32, %s31
          %s426 = sadd.s32 %s425, %s30
          %s427 = smul.addr %s426, 128
          %s428 = scalar_lea.hbm %s4, %s427
          %s430 = sshll.u32 %s418, 4
          %s431 = int_to_ptr.vmem [resolvable:$true] %s430
          %433 = dma.vmem_to_hbm [thread:$0]  %s431, 128, %s428, %s415
        $region48: #{tpu_custom_call.1} parent=35 // pred_fallthru
          _
      $region36: #{tpu_custom_call.1} parent=5 // pred_fallthru
        _
      %p434 = scmp.le.s32.totalorder 2, %s20
      // Predicated region
      $region49: #{tpu_custom_call.1} parent=5 // pred_check
        %p435 = pneg %p434
      $region50: #{tpu_custom_call.1} parent=5 // pred_check_branch
        %437 = sbr.rel (%p435) target = $region52
      $region51: #{tpu_custom_call.1} parent=5 // pred_region
        %s438 = ssub.s32 %s20, 2
        // Predicated region
        $region53: #{tpu_custom_call.1} parent=51 // pred_check
          %p439 = pneg %p177
        $region54: #{tpu_custom_call.1} parent=51 // pred_check_branch
          %441 = sbr.rel (%p439) target = $region56
        $region55: #{tpu_custom_call.1} parent=51 // pred_region
          %s442 = sand.u32 %s162, 1
          %s443 = scalar_lea.sflag [#allocation5], %s442
          %s444 = sand.u32 %s162, 1
          %s445 = smul.addr %s444, 8
          %s446 = scalar_lea.vmem [#allocation8], %s445
          %447 = dma.done %s443, 128
        $region56: #{tpu_custom_call.1} parent=51 // pred_fallthru
          _
      $region52: #{tpu_custom_call.1} parent=5 // pred_fallthru
        _
    $region6: #{tpu_custom_call.1} parent=1 // loop_footer
      %s24 = sadd.s32 1, %s20
    $region7: #{tpu_custom_call.1} parent=1 // loop_footer_branch
      %19 = sbr.rel target = $region3
    $region8: #{tpu_custom_call.1} parent=1 // loop_exit
      _
    %448 = vsyncpa [#allocation4], 1
    %s449 = scalar_lea.sflag [#allocation4], 1
    %450 = vsyncpa %s449, 1
    %451 = vsyncpa [#allocation7], 1
    %s452 = scalar_lea.sflag [#allocation7], 1
    %453 = vsyncpa %s452, 1
    %454 = vsyncpa [#allocation5], 1
    %s455 = scalar_lea.sflag [#allocation5], 1
    %456 = vsyncpa %s455, 1

</llo_original>
